<compile_context>
chip_gen: v7x
topology: tpu7x:2x2x1
jax: 0.10.0
libtpu: 0.0.40
codegen_flags: <defaults>
</compile_context>

<pallas_src>
import functools

import jax
import jax.numpy as jnp
from jax.experimental import pallas as pl
from jax.experimental.pallas import tpu as pltpu


def _triplet_loss_kernel(sim_ref, mask_ref, out_ref, *,
                         margin, max_violation, num_i, tile_i):
    # (tile_i, num_t) blocks; upcast sim to f32 in-kernel (cheap vs. saved HBM bytes)
    sim = sim_ref[...].astype(jnp.float32)
    is_pos = mask_ref[...] != 0

    big = jnp.float32(3e38)
    pos_sim = jnp.where(is_pos, sim, big)
    min_pos = jnp.min(pos_sim, axis=-1, keepdims=True)            # (tile_i, 1)

    # Fold margin into the per-row scalar: cost = max(sim - (min_pos - margin), 0)
    thr = min_pos - jnp.float32(margin)                           # (tile_i, 1)
    cost = jnp.maximum(sim - thr, 0.0)
    cost = jnp.where(is_pos, 0.0, cost)

    if max_violation:
        row_cost = jnp.max(cost, axis=-1, keepdims=True)          # (tile_i, 1)
    else:
        row_cost = jnp.sum(cost, axis=-1, keepdims=True)          # (tile_i, 1)

    # Mask rows of a padded last tile (row index >= num_i) so garbage from the
    # padded input region never reaches the output.
    row0 = pl.program_id(0) * tile_i
    rows = row0 + jax.lax.broadcasted_iota(jnp.int32, (tile_i, 1), 0)
    row_cost = jnp.where(rows < num_i, row_cost, 0.0)

    # Per-tile partial sum, replicated across a full (8, 128) vreg so the
    # write-back is a single unmasked lane-dense store.
    tile_sum = jnp.sum(row_cost, axis=0, keepdims=True)           # (1, 1)
    out_ref[...] = jnp.broadcast_to(tile_sum, (8, 128))


def _vmem_budget_and_cap():
    """Budget/tile-cap tuned to the part's VMEM size (conservative if unknown)."""
    vmem_cap = None
    try:
        vmem_cap = getattr(pltpu.get_tpu_info(), "vmem_capacity_bytes", None)
    except Exception:
        vmem_cap = None
    if vmem_cap is not None and vmem_cap >= 96 * 1024 * 1024:
        return 24 * 1024 * 1024, 1024      # v5e / v6e: 128 MiB VMEM
    return 16 * 1024 * 1024, 512           # v7x (64 MiB / TC) or unknown


def _per_row_bytes(num_t, sim_itemsize, mask_itemsize):
    # 2 pipeline buffers per input stream ...
    per_row = 2 * num_t * (sim_itemsize + mask_itemsize)
    # ... plus the materialized f32 upcast of sim when it is not already f32
    # (sim is consumed twice: positive-min and hinge).
    if sim_itemsize != 4:
        per_row += 4 * num_t
    return per_row


def _choose_tile_i(num_i, num_t, sim_itemsize, mask_itemsize,
                   budget_bytes, tile_cap):
    """Pick a row tile that (a) fits the VMEM budget, (b) respects the per-part
    cap, and (c) is balanced across the grid so the last tile isn't padding."""
    per_row = _per_row_bytes(num_t, sim_itemsize, mask_itemsize)
    tile = int(budget_bytes // max(per_row, 1))
    tile = min(tile, tile_cap)
    if tile >= num_i:
        return int(num_i)                  # single block == full array dims
    tile = max(tile, 32)                   # sublane-tiling floor (int8 mask)
    # Balance: keep the tile count implied by the budget, then split rows evenly.
    ntiles = -(-num_i // tile)
    tile = -(-num_i // ntiles)
    tile = min(((tile + 31) // 32) * 32, num_i)
    return int(tile)


def triplet_loss(sim, targets, *, margin=0.0, max_violation=False,
                 tile_i=None, vmem_limit_bytes=32 * 1024 * 1024):
    """sim: (num_i, num_t) float (f32 or bf16); targets: (num_i, num_t) bool."""
    num_i, num_t = sim.shape
    mask = targets.astype(jnp.int8)        # narrow mask stream; compared != 0 in-kernel

    budget, cap = _vmem_budget_and_cap()
    if tile_i is None:
        tile_i = _choose_tile_i(num_i, num_t, sim.dtype.itemsize,
                                mask.dtype.itemsize, budget, cap)
    tile_i = int(min(tile_i, num_i))
    num_tiles = pl.cdiv(num_i, tile_i)

    # Make sure the scoped-VMEM limit covers the real footprint
    # (double-buffered inputs + in-kernel f32 upcast temporary) with headroom.
    footprint = tile_i * _per_row_bytes(num_t, sim.dtype.itemsize,
                                        mask.dtype.itemsize) + (2 << 20)
    vmem_limit = int(max(vmem_limit_bytes, footprint))

    kernel = functools.partial(
        _triplet_loss_kernel,
        margin=float(margin),
        max_violation=bool(max_violation),
        num_i=int(num_i),
        tile_i=int(tile_i),
    )

    partials = pl.pallas_call(
        kernel,
        out_shape=jax.ShapeDtypeStruct((num_tiles * 8, 128), jnp.float32),
        grid=(num_tiles,),
        in_specs=[
            pl.BlockSpec((tile_i, num_t), lambda i: (i, 0)),
            pl.BlockSpec((tile_i, num_t), lambda i: (i, 0)),
        ],
        out_specs=pl.BlockSpec((8, 128), lambda i: (i, 0)),
        compiler_params=pltpu.CompilerParams(
            dimension_semantics=("parallel",),
            vmem_limit_bytes=vmem_limit,
        ),
    )(sim, mask)

    # Element (0, 0) of each (8, 128) output block holds that tile's partial sum.
    per_tile = partials[::8, 0]            # (num_tiles,)
    return jnp.sum(per_tile) / jnp.float32(num_i)


def _reference(sim, targets, margin=0.0, max_violation=False):
    # pure-JAX (vectorized) reference mirroring the PyTorch loop
    sim = sim.astype(jnp.float32)
    min_pos = jnp.min(jnp.where(targets, sim, jnp.inf), axis=-1, keepdims=True)
    cost = jnp.maximum(margin + sim - min_pos, 0.0)
    cost = jnp.where(targets, 0.0, cost)
    if max_violation:
        row = jnp.max(cost, axis=-1)
    else:
        row = jnp.sum(cost, axis=-1)
    return jnp.sum(row) / sim.shape[0]


if __name__ == "__main__":
    key = jax.random.PRNGKey(0)
    k1, k2, k3, k4, k5, k6 = jax.random.split(key, 6)

    # --- Test 1: single-tile path (block == full array), small shapes ---
    num_i, num_t = 8, 128
    sim = jax.random.normal(k1, (num_i, num_t), dtype=jnp.float32)
    targets = jax.random.bernoulli(k2, p=0.1, shape=(num_i, num_t))
    # guarantee at least one positive per row (PyTorch masked_select().min()
    # requires a non-empty selection)
    targets = targets.at[jnp.arange(num_i), jnp.arange(num_i) % num_t].set(True)

    out = jax.block_until_ready(
        triplet_loss(sim, targets, margin=0.0, max_violation=False))
    ref = _reference(sim, targets, margin=0.0, max_violation=False)
    assert jnp.allclose(out, ref, rtol=1e-5, atol=1e-5), (out, ref)

    out_mv = jax.block_until_ready(
        triplet_loss(sim, targets, margin=0.2, max_violation=True))
    ref_mv = _reference(sim, targets, margin=0.2, max_violation=True)
    assert jnp.allclose(out_mv, ref_mv, rtol=1e-5, atol=1e-5), (out_mv, ref_mv)

    # --- Test 2: multi-tile grid with a padded final tile (72 rows, tile=32) ---
    num_i2, num_t2 = 72, 256
    sim2 = jax.random.normal(k3, (num_i2, num_t2), dtype=jnp.float32)
    targets2 = jax.random.bernoulli(k4, p=0.05, shape=(num_i2, num_t2))
    targets2 = targets2.at[jnp.arange(num_i2), jnp.arange(num_i2) % num_t2].set(True)

    out2 = jax.block_until_ready(
        triplet_loss(sim2, targets2, margin=0.1, max_violation=False, tile_i=32))
    ref2 = _reference(sim2, targets2, margin=0.1, max_violation=False)
    assert jnp.allclose(out2, ref2, rtol=1e-5, atol=1e-5), (out2, ref2)

    # --- Test 3: native bf16 sim stream (kernel upcasts to f32 internally) ---
    sim_bf16 = sim2.astype(jnp.bfloat16)
    out3 = jax.block_until_ready(
        triplet_loss(sim_bf16, targets2, margin=0.1, max_violation=True, tile_i=32))
    ref3 = _reference(sim_bf16.astype(jnp.float32), targets2,
                      margin=0.1, max_violation=True)
    assert jnp.allclose(out3, ref3, rtol=1e-3, atol=1e-3), (out3, ref3)

    # --- Test 4: auto-chosen, balanced multi-tile grid (exercises _choose_tile_i) ---
    num_i4, num_t4 = 600, 384
    sim4 = jax.random.normal(k5, (num_i4, num_t4), dtype=jnp.float32)
    targets4 = jax.random.bernoulli(k6, p=0.02, shape=(num_i4, num_t4))
    targets4 = targets4.at[jnp.arange(num_i4), jnp.arange(num_i4) % num_t4].set(True)

    out4 = jax.block_until_ready(
        triplet_loss(sim4, targets4, margin=0.05, max_violation=False))
    ref4 = _reference(sim4, targets4, margin=0.05, max_violation=False)
    assert jnp.allclose(out4, ref4, rtol=1e-4, atol=1e-4), (out4, ref4)

    print("KERNEL_OK")
</pallas_src>

<mosaic_0001>
module attributes {stable_mosaic.version = 11 : i64} {
  func.func @_triplet_loss_kernel(%arg0: i32, %arg1: memref<8x128xf32, #tpu.memory_space<vmem>>, %arg2: memref<8x128xi8, #tpu.memory_space<vmem>>, %arg3: memref<8x128xf32, #tpu.memory_space<vmem>>) attributes {dimension_semantics = [#tpu.dimension_semantics<parallel>], iteration_bounds = array<i64: 1>, scalar_prefetch = 0 : i64, scratch_operands = 0 : i64, tpu.core_type = #tpu.core_type<tc>, window_params = [{transform_indices = @transform_0, window_bounds = array<i64: 8, 128>}, {transform_indices = @transform_1, window_bounds = array<i64: 8, 128>}, {transform_indices = @transform_2, window_bounds = array<i64: 8, 128>}]} {
    %c0 = arith.constant 0 : index
    %c0_0 = arith.constant 0 : index
    %0 = vector.load %arg1[%c0, %c0_0] : memref<8x128xf32, #tpu.memory_space<vmem>>, vector<8x128xf32>
    %c0_1 = arith.constant 0 : index
    %c0_2 = arith.constant 0 : index
    %1 = vector.load %arg2[%c0_1, %c0_2] : memref<8x128xi8, #tpu.memory_space<vmem>>, vector<8x128xi8>
    %c0_i8 = arith.constant 0 : i8
    %2 = vector.broadcast %c0_i8 : i8 to vector<8x128xi8>
    %3 = arith.cmpi ne, %1, %2 : vector<8x128xi8>
    %cst = arith.constant 3.000000e+38 : f32
    %4 = vector.broadcast %cst : f32 to vector<8x128xf32>
    %5 = arith.select %3, %0, %4 : vector<8x128xi1>, vector<8x128xf32>
    %cst_3 = arith.constant dense<0x7F800000> : vector<8xf32>
    %6 = vector.multi_reduction <minimumf>, %5, %cst_3 [1] : vector<8x128xf32> to vector<8xf32>
    %7 = vector.shape_cast %6 : vector<8xf32> to vector<8x1xf32>
    %cst_4 = arith.constant 0.000000e+00 : f32
    %8 = vector.broadcast %cst_4 : f32 to vector<8x1xf32>
    %9 = arith.subf %7, %8 : vector<8x1xf32>
    %10 = vector.broadcast %9 : vector<8x1xf32> to vector<8x128xf32>
    %11 = arith.subf %0, %10 : vector<8x128xf32>
    %cst_5 = arith.constant 0.000000e+00 : f32
    %12 = vector.broadcast %cst_5 : f32 to vector<8x128xf32>
    %13 = arith.maximumf %11, %12 : vector<8x128xf32>
    %cst_6 = arith.constant 0.000000e+00 : f32
    %14 = vector.broadcast %cst_6 : f32 to vector<8x128xf32>
    %15 = arith.select %3, %14, %13 : vector<8x128xi1>, vector<8x128xf32>
    %cst_7 = arith.constant dense<0.000000e+00> : vector<8xf32>
    %16 = vector.multi_reduction <add>, %15, %cst_7 [1] : vector<8x128xf32> to vector<8xf32>
    %17 = vector.shape_cast %16 : vector<8xf32> to vector<8x1xf32>
    %c8_i32 = arith.constant 8 : i32
    %18 = arith.muli %arg0, %c8_i32 : i32
    %19 = tpu.iota {dimensions = array<i32: 0>} : vector<8x1xi32>
    %20 = vector.broadcast %18 : i32 to vector<8x1xi32>
    %21 = arith.addi %20, %19 : vector<8x1xi32>
    %c8_i32_8 = arith.constant 8 : i32
    %22 = vector.broadcast %c8_i32_8 : i32 to vector<8x1xi32>
    %23 = arith.cmpi slt, %21, %22 : vector<8x1xi32>
    %cst_9 = arith.constant 0.000000e+00 : f32
    %24 = vector.broadcast %cst_9 : f32 to vector<8x1xf32>
    %25 = arith.select %23, %17, %24 : vector<8x1xi1>, vector<8x1xf32>
    %cst_10 = arith.constant dense<0.000000e+00> : vector<1xf32>
    %26 = vector.multi_reduction <add>, %25, %cst_10 [0] : vector<8x1xf32> to vector<1xf32>
    %27 = vector.shape_cast %26 : vector<1xf32> to vector<1x1xf32>
    %28 = vector.shape_cast %27 : vector<1x1xf32> to vector<1x1xf32>
    %29 = vector.broadcast %28 : vector<1x1xf32> to vector<8x128xf32>
    %c0_11 = arith.constant 0 : index
    %c0_12 = arith.constant 0 : index
    %30 = vector.load %arg3[%c0_11, %c0_12] : memref<8x128xf32, #tpu.memory_space<vmem>>, vector<8x128xf32>
    tpu.vector_store %arg3[%c0_11, %c0_12], %29 {strides = array<i32>} : memref<8x128xf32, #tpu.memory_space<vmem>>, vector<8x128xf32>,
    return
  }
  func.func @transform_0(%arg0: i32) -> (i32, i32) {
    %c0_i32 = arith.constant 0 : i32
    %c0_i32_0 = arith.constant 0 : i32
    return %arg0, %c0_i32 : i32, i32
  }
  func.func @transform_1(%arg0: i32) -> (i32, i32) {
    %c0_i32 = arith.constant 0 : i32
    %c0_i32_0 = arith.constant 0 : i32
    return %arg0, %c0_i32 : i32, i32
  }
  func.func @transform_2(%arg0: i32) -> (i32, i32) {
    %c0_i32 = arith.constant 0 : i32
    %c0_i32_0 = arith.constant 0 : i32
    return %arg0, %c0_i32 : i32, i32
  }
}

</mosaic_0001>

<llo_original>
// kernel: tpu_custom_call.1
$region0: #{tpu_custom_call.1}
  #allocation0 [shape = 'u32[]', space=smem, size = 0x4, offset = 0x4, fixed_abs, tag = 'smem constant byte address 0x4 - core index']
  #allocation1 [shape = 'u32[144,128]{1,0:T(1,128)}', space=vmem, size = 0x12000, scoped, tag = 'internal scratch']
  %s0 = inlined_call_operand.hbm [shape: f32[8,128], index: 0, kind: input, shape index: {}]
  %s1 = inlined_call_operand.vmem [shape: s8[8,128], index: 1, kind: input, shape index: {}]
  %s2 = inlined_call_operand.hbm [shape: f32[8,128], index: 2, kind: output, shape index: {}]
  %s3 = sld [smem:[#allocation0]]
  $region22: #{tpu_custom_call.1} parent=0
    _
  %s5 = ssub.s32 1, %s3
  %s6 = scalar_select 0, %s5, %s3
  $region1: #{tpu_custom_call.1} parent=0
    #allocation2 [shape = 'u8[4096]{0}', space=vmem, size = 0x1000, scoped, tag = 'input window, operand 0, single buffered']
    #allocation3 [shape = 's32[1]{0}', space=sflag, size = 0x4, scoped, tag = 'scoped memory for tpu_custom_call.1']
    #allocation4 [shape = 's32[1]{0}', space=sflag, size = 0x4, scoped, tag = 'scoped memory for tpu_custom_call.1']
    #allocation5 [shape = 'u8[4096]{0}', space=vmem, size = 0x1000, scoped, tag = 'output window, operand 0, single buffered']
    %7 = vsyncpa [#allocation3], 0
    %8 = vsyncpa [#allocation4], 0
    // Predicated region
    $region2: #{tpu_custom_call.1} parent=1 // pred_check
      _
    $region3: #{tpu_custom_call.1} parent=1 // pred_check_branch
      %10 = sbr.rel (0) target = $region5
    $region4: #{tpu_custom_call.1} parent=1 // pred_region
      %s12 = ssub.s32 128, 128
      %13 = vsyncadd [#allocation3], %s12
      %s15 = sshll.u32 [#allocation2], 4
      %s16 = int_to_ptr.vmem [resolvable:$true] %s15
      %18 = dma.hbm_to_vmem [thread:$0]  %s0, 128, %s16, [#allocation3]
    $region5: #{tpu_custom_call.1} parent=1 // pred_fallthru
      _
    // Predicated region
    $region6: #{tpu_custom_call.1} parent=1 // pred_check
      _
    $region7: #{tpu_custom_call.1} parent=1 // pred_check_branch
      %20 = sbr.rel (0) target = $region9
    $region8: #{tpu_custom_call.1} parent=1 // pred_region
      _
    $region9: #{tpu_custom_call.1} parent=1 // pred_fallthru
      _
    // Predicated region
    $region10: #{tpu_custom_call.1} parent=1 // pred_check
      _
    $region11: #{tpu_custom_call.1} parent=1 // pred_check_branch
      %22 = sbr.rel (0) target = $region13
    $region12: #{tpu_custom_call.1} parent=1 // pred_region
      %23 = dma.done [#allocation3], 128
    $region13: #{tpu_custom_call.1} parent=1 // pred_fallthru
      _
    %v26 = vld [vmem:[#allocation2] sm:$0xff]
    %v27 = vld [vmem:[%s1] sm:$0x3]
    %vm28 = vnez %v27
    %v29 = vsel %vm28, 16843009, 0
    %v30 = vunpack.c.0.s8 %v29
    %vm31 = vcmp.ne.s32.totalorder %v30, 0
    %v32 = vsel %vm31, %v26, 3e+38
    %33 = vmin.xlane.f32.xlu0 %v32
    %v34 = vpop.xlane.xlu0 %33
    %v35 = vsub.f32 %v26, %v34
    %v36 = vmax.f32 %v35, 0.0
    %v37 = vsel %vm31, 0.0, %v36
    %38 = vadd.xlane.f32.xlu0 %v37
    %v39 = vpop.xlane.xlu0 %38
    %s40 = smul.u32 0, 8
    %v41 = vlaneseq
    %v42 = vshrl.u32 %v41, 7
    %v43 = vstv %s40
    %v44 = vadd.s32 %v43, %v42
    %vm45 = vcmp.lt.s32.totalorder %v44, 8
    %v46 = vsel %vm45, %v39, 0.0
    %v47 = vrot.slane %v46, 4
    %v48 = vadd.f32 %v46, %v47
    %v49 = vrot.slane %v48, 2
    %v50 = vadd.f32 %v48, %v49
    %v51 = vrot.slane %v50, 1
    %v52 = vadd.f32 %v50, %v51
    %53 = vst [vmem:[#allocation5] sm:$0xff] %v52
    // Predicated region
    $region14: #{tpu_custom_call.1} parent=1 // pred_check
      _
    $region15: #{tpu_custom_call.1} parent=1 // pred_check_branch
      %55 = sbr.rel (0) target = $region17
    $region16: #{tpu_custom_call.1} parent=1 // pred_region
      %s57 = ssub.s32 128, 128
      %58 = vsyncadd [#allocation4], %s57
      %s60 = sshll.u32 [#allocation5], 4
      %s61 = int_to_ptr.vmem [resolvable:$true] %s60
      %63 = dma.vmem_to_hbm [thread:$0]  %s61, 128, %s2, [#allocation4]
    $region17: #{tpu_custom_call.1} parent=1 // pred_fallthru
      _
    // Predicated region
    $region18: #{tpu_custom_call.1} parent=1 // pred_check
      _
    $region19: #{tpu_custom_call.1} parent=1 // pred_check_branch
      %65 = sbr.rel (0) target = $region21
    $region20: #{tpu_custom_call.1} parent=1 // pred_region
      %66 = dma.done [#allocation4], 128
    $region21: #{tpu_custom_call.1} parent=1 // pred_fallthru
      _
    %67 = vsyncpa [#allocation3], 1
    %68 = vsyncpa [#allocation4], 1

</llo_original>
